<compile_context>
chip_gen: v7x
topology: tpu7x:2x2x1
jax: 0.10.0
libtpu: 0.0.40
codegen_flags: <defaults>
</compile_context>

<pallas_src>
import functools

import jax
import jax.numpy as jnp
from jax.experimental import pallas as pl
from jax.experimental.pallas import tpu as pltpu

HIDDEN_LAYER_SIZE = 128


def actor_kernel(x_ref, p_ref, o_ref, *, n_in, n_out):
    # p_ref packed-slab row layout (all rows are [1, H]):
    #   rows [0 : n_in]               -> w1^T   (row k = weights of input feature k)
    #   row  [n_in]                   -> b1
    #   rows [n_in+1 : n_in+1+n_out]  -> w2 in [O, H] layout (row o)
    #   row  [n_in+1+n_out]           -> b2 lane-padded (b2[o] at lane o, zeros elsewhere)
    x = x_ref[...]                                        # [B, n_in]

    # ---- Layer 1 on the VPU: K is tiny, so unroll k and do broadcast MACs on
    # a single [B, H] slab instead of an MXU matmul. ----------------------------
    h = x[:, 0:1] * p_ref[0:1, :]                         # [B,1] * [1,H] -> [B,H]
    for k in range(1, n_in):                              # static unroll (K = 4)
        h = h + x[:, k:k + 1] * p_ref[k:k + 1, :]
    h = jnp.maximum(h + p_ref[n_in:n_in + 1, :], 0.0)     # bias + ReLU, [B, H]

    # ---- Layer 2 on VPU + XLU: O vmuls + O lane-sum reductions replace the
    # 8x128x2 MXU matmul (which would be pure fill/drain latency here). --------
    cols = []
    for o in range(n_out):                                # static unroll (O = 2)
        w2_row = p_ref[n_in + 1 + o:n_in + 2 + o, :]      # [1, H]
        cols.append(jnp.sum(h * w2_row, axis=-1, keepdims=True))  # [B, 1]
    logits = jnp.concatenate(cols, axis=-1)               # [B, O]
    b2 = p_ref[n_in + 1 + n_out:n_in + 2 + n_out, 0:n_out]  # [1, O] (lane sub-slice)
    logits = logits + b2

    # ---- softmax over dim=0 (batch axis) — exact F.softmax(..., dim=0). -------
    m = jnp.max(logits, axis=0, keepdims=True)
    e = jnp.exp(logits - m)
    denom = jnp.sum(e, axis=0, keepdims=True)
    # Exact division so each column sums to 1 (probabilities feed sampling /
    # log-prob computation in A2C).
    o_ref[...] = (e / denom).astype(o_ref.dtype)


def prepare_actor_params(w1, b1, w2, b2):
    """One-time layout prep (call at init, NOT per step).

    PyTorch layout in:  w1 [H, in], b1 [H], w2 [O, H], b2 [O].
    Packed slab out:    [in + 1 + O + 1, H] f32 (one [8,128] vreg for CartPole).
    """
    w1 = jnp.asarray(w1, jnp.float32)
    b1 = jnp.asarray(b1, jnp.float32)
    w2 = jnp.asarray(w2, jnp.float32)
    b2 = jnp.asarray(b2, jnp.float32)
    H = w1.shape[0]
    O = w2.shape[0]
    b2_padded = jnp.zeros((1, H), jnp.float32).at[0, :O].set(b2)
    slab = jnp.concatenate([w1.T, b1[None, :], w2, b2_padded], axis=0)
    return slab


@jax.jit
def actor_forward(x, param_slab):
    """x: [B, inputs] f32; param_slab from prepare_actor_params()."""
    B, K = x.shape
    n_rows, H = param_slab.shape
    O = n_rows - K - 2

    flops = 2 * B * (K * H + H * O)
    bytes_accessed = 4 * (x.size + param_slab.size + B * O)

    vmem = pl.BlockSpec(memory_space=pltpu.MemorySpace.VMEM)
    kernel = functools.partial(actor_kernel, n_in=K, n_out=O)
    # No grid: <16 KB working set, single invocation is structurally optimal on
    # v5e/v6e. On v7x, once B grows (vectorized envs), add a batch grid with
    # compiler_params=pltpu.CompilerParams(dimension_semantics=("parallel",))
    # to use both TensorCores.
    return pl.pallas_call(
        kernel,
        out_shape=jax.ShapeDtypeStruct((B, O), jnp.float32),
        in_specs=[vmem, vmem],
        out_specs=vmem,
        cost_estimate=pl.CostEstimate(
            flops=flops, transcendentals=B * O, bytes_accessed=bytes_accessed),
    )(x, param_slab)


def _init_linear(key, out_features, in_features):
    # Deterministic synthetic init (Kaiming-uniform-ish bound like nn.Linear).
    kw, kb = jax.random.split(key)
    bound = 1.0 / jnp.sqrt(jnp.float32(in_features))
    w = jax.random.uniform(kw, (out_features, in_features), jnp.float32, -bound, bound)
    b = jax.random.uniform(kb, (out_features,), jnp.float32, -bound, bound)
    return w, b


if __name__ == "__main__":
    # CartPole-like sizes: 4 observations, 2 actions, batch of 8.
    inputs, outputs, batch = 4, 2, 8

    key = jax.random.PRNGKey(0)
    k_x, k_h1, k_pi = jax.random.split(key, 3)

    x = jax.random.normal(k_x, (batch, inputs), jnp.float32)
    w1, b1 = _init_linear(k_h1, HIDDEN_LAYER_SIZE, inputs)   # h1: Linear(inputs, 128)
    w2, b2 = _init_linear(k_pi, outputs, HIDDEN_LAYER_SIZE)  # pi: Linear(128, outputs)

    # One-time layout prep (init-time), then the hot path is a single jitted
    # pallas_call with exactly two inputs.
    param_slab = prepare_actor_params(w1, b1, w2, b2)
    out = actor_forward(x, param_slab)
    out = jax.block_until_ready(out)

    # Pure-JAX reference for sanity (same semantics, incl. dim=0 softmax).
    h_ref = jnp.maximum(x @ w1.T + b1, 0.0)
    logits_ref = h_ref @ w2.T + b2
    ref = jax.nn.softmax(logits_ref, axis=0)
    assert out.shape == (batch, outputs)
    assert jnp.allclose(out, ref, atol=1e-5, rtol=1e-5)
    # Exact-division softmax: each column (dim=0 normalization) sums to ~1.
    assert jnp.allclose(jnp.sum(out, axis=0), jnp.ones((outputs,)), atol=1e-5)

    print("KERNEL_OK")
</pallas_src>

<mosaic_0001>
module attributes {stable_mosaic.version = 11 : i64} {
  func.func @actor_kernel(%arg0: memref<8x4xf32, #tpu.memory_space<vmem>>, %arg1: memref<8x128xf32, #tpu.memory_space<vmem>>, %arg2: memref<8x2xf32, #tpu.memory_space<vmem>>) attributes {dimension_semantics = [], scalar_prefetch = 0 : i64, scratch_operands = 0 : i64, tpu.core_type = #tpu.core_type<tc>} {
    %c0 = arith.constant 0 : index
    %c0_0 = arith.constant 0 : index
    %0 = vector.load %arg0[%c0, %c0_0] : memref<8x4xf32, #tpu.memory_space<vmem>>, vector<8x4xf32>
    %1 = vector.extract_strided_slice %0 {offsets = [0, 0], sizes = [8, 1], strides = [1, 1]} : vector<8x4xf32> to vector<8x1xf32>
    %c0_1 = arith.constant 0 : index
    %c0_2 = arith.constant 0 : index
    %2 = vector.load %arg1[%c0_1, %c0_2] : memref<8x128xf32, #tpu.memory_space<vmem>>, vector<1x128xf32>
    %3 = vector.broadcast %1 : vector<8x1xf32> to vector<8x128xf32>
    %4 = vector.broadcast %2 : vector<1x128xf32> to vector<8x128xf32>
    %5 = arith.mulf %3, %4 : vector<8x128xf32>
    %6 = vector.extract_strided_slice %0 {offsets = [0, 1], sizes = [8, 1], strides = [1, 1]} : vector<8x4xf32> to vector<8x1xf32>
    %c1 = arith.constant 1 : index
    %c0_3 = arith.constant 0 : index
    %7 = vector.load %arg1[%c1, %c0_3] : memref<8x128xf32, #tpu.memory_space<vmem>>, vector<1x128xf32>
    %8 = vector.broadcast %6 : vector<8x1xf32> to vector<8x128xf32>
    %9 = vector.broadcast %7 : vector<1x128xf32> to vector<8x128xf32>
    %10 = arith.mulf %8, %9 : vector<8x128xf32>
    %11 = arith.addf %5, %10 : vector<8x128xf32>
    %12 = vector.extract_strided_slice %0 {offsets = [0, 2], sizes = [8, 1], strides = [1, 1]} : vector<8x4xf32> to vector<8x1xf32>
    %c2 = arith.constant 2 : index
    %c0_4 = arith.constant 0 : index
    %13 = vector.load %arg1[%c2, %c0_4] : memref<8x128xf32, #tpu.memory_space<vmem>>, vector<1x128xf32>
    %14 = vector.broadcast %12 : vector<8x1xf32> to vector<8x128xf32>
    %15 = vector.broadcast %13 : vector<1x128xf32> to vector<8x128xf32>
    %16 = arith.mulf %14, %15 : vector<8x128xf32>
    %17 = arith.addf %11, %16 : vector<8x128xf32>
    %18 = vector.extract_strided_slice %0 {offsets = [0, 3], sizes = [8, 1], strides = [1, 1]} : vector<8x4xf32> to vector<8x1xf32>
    %c3 = arith.constant 3 : index
    %c0_5 = arith.constant 0 : index
    %19 = vector.load %arg1[%c3, %c0_5] : memref<8x128xf32, #tpu.memory_space<vmem>>, vector<1x128xf32>
    %20 = vector.broadcast %18 : vector<8x1xf32> to vector<8x128xf32>
    %21 = vector.broadcast %19 : vector<1x128xf32> to vector<8x128xf32>
    %22 = arith.mulf %20, %21 : vector<8x128xf32>
    %23 = arith.addf %17, %22 : vector<8x128xf32>
    %c4 = arith.constant 4 : index
    %c0_6 = arith.constant 0 : index
    %24 = vector.load %arg1[%c4, %c0_6] : memref<8x128xf32, #tpu.memory_space<vmem>>, vector<1x128xf32>
    %25 = vector.broadcast %24 : vector<1x128xf32> to vector<8x128xf32>
    %26 = arith.addf %23, %25 : vector<8x128xf32>
    %cst = arith.constant 0.000000e+00 : f32
    %27 = vector.broadcast %cst : f32 to vector<8x128xf32>
    %28 = arith.maximumf %26, %27 : vector<8x128xf32>
    %c5 = arith.constant 5 : index
    %c0_7 = arith.constant 0 : index
    %29 = vector.load %arg1[%c5, %c0_7] : memref<8x128xf32, #tpu.memory_space<vmem>>, vector<1x128xf32>
    %30 = vector.broadcast %29 : vector<1x128xf32> to vector<8x128xf32>
    %31 = arith.mulf %28, %30 : vector<8x128xf32>
    %cst_8 = arith.constant dense<0.000000e+00> : vector<8xf32>
    %32 = vector.multi_reduction <add>, %31, %cst_8 [1] : vector<8x128xf32> to vector<8xf32>
    %33 = vector.shape_cast %32 : vector<8xf32> to vector<8x1xf32>
    %c6 = arith.constant 6 : index
    %c0_9 = arith.constant 0 : index
    %34 = vector.load %arg1[%c6, %c0_9] : memref<8x128xf32, #tpu.memory_space<vmem>>, vector<1x128xf32>
    %35 = vector.broadcast %34 : vector<1x128xf32> to vector<8x128xf32>
    %36 = arith.mulf %28, %35 : vector<8x128xf32>
    %cst_10 = arith.constant dense<0.000000e+00> : vector<8xf32>
    %37 = vector.multi_reduction <add>, %36, %cst_10 [1] : vector<8x128xf32> to vector<8xf32>
    %38 = vector.shape_cast %37 : vector<8xf32> to vector<8x1xf32>
    %39 = tpu.concatenate %33, %38 in 1 : vector<8x1xf32>, vector<8x1xf32> -> vector<8x2xf32>
    %c7 = arith.constant 7 : index
    %c0_11 = arith.constant 0 : index
    %40 = vector.load %arg1[%c7, %c0_11] : memref<8x128xf32, #tpu.memory_space<vmem>>, vector<1x2xf32>
    %41 = vector.broadcast %40 : vector<1x2xf32> to vector<8x2xf32>
    %42 = arith.addf %39, %41 : vector<8x2xf32>
    %cst_12 = arith.constant dense<0xFF800000> : vector<2xf32>
    %43 = vector.multi_reduction <maximumf>, %42, %cst_12 [0] : vector<8x2xf32> to vector<2xf32>
    %44 = vector.shape_cast %43 : vector<2xf32> to vector<1x2xf32>
    %45 = vector.broadcast %44 : vector<1x2xf32> to vector<8x2xf32>
    %46 = arith.subf %42, %45 : vector<8x2xf32>
    %47 = math.exp %46 : vector<8x2xf32>
    %cst_13 = arith.constant dense<0.000000e+00> : vector<2xf32>
    %48 = vector.multi_reduction <add>, %47, %cst_13 [0] : vector<8x2xf32> to vector<2xf32>
    %49 = vector.shape_cast %48 : vector<2xf32> to vector<1x2xf32>
    %50 = vector.broadcast %49 : vector<1x2xf32> to vector<8x2xf32>
    %51 = arith.divf %47, %50 : vector<8x2xf32>
    %c0_14 = arith.constant 0 : index
    %c0_15 = arith.constant 0 : index
    %52 = vector.load %arg2[%c0_14, %c0_15] : memref<8x2xf32, #tpu.memory_space<vmem>>, vector<8x2xf32>
    tpu.vector_store %arg2[%c0_14, %c0_15], %51 {strides = array<i32>} : memref<8x2xf32, #tpu.memory_space<vmem>>, vector<8x2xf32>,
    return
  }
}

</mosaic_0001>

<llo_original>
// kernel: actor_forward.1
$region0: #{actor_forward.1}
  #allocation0 [shape = 'u32[]', space=smem, size = 0x4, offset = 0x4, fixed_abs, tag = 'smem constant byte address 0x4 - core index']
  #allocation1 [shape = 'u32[144,128]{1,0:T(1,128)}', space=vmem, size = 0x12000, scoped, tag = 'internal scratch']
  %s0 = inlined_call_operand.vmem [shape: f32[8,4], index: 0, kind: input, shape index: {}]
  %s1 = inlined_call_operand.vmem [shape: f32[8,128], index: 1, kind: input, shape index: {}]
  %s2 = inlined_call_operand.vmem [shape: f32[8,2], index: 2, kind: output, shape index: {}]
  %s3 = sld [smem:[#allocation0]]
  $region18: #{actor_forward.1} parent=0
    _
  %s5 = ssub.s32 1, %s3
  %s6 = scalar_select 0, %s5, %s3
  // Predicated region
  $region2: #{actor_forward.1} parent=0 // pred_check
    _
  $region3: #{actor_forward.1} parent=0 // pred_check_branch
    %8 = sbr.rel (0) target = $region5
  $region4: #{actor_forward.1} parent=0 // pred_region
    _
  $region5: #{actor_forward.1} parent=0 // pred_fallthru
    _
  // Predicated region
  $region6: #{actor_forward.1} parent=0 // pred_check
    _
  $region7: #{actor_forward.1} parent=0 // pred_check_branch
    %10 = sbr.rel (0) target = $region9
  $region8: #{actor_forward.1} parent=0 // pred_region
    _
  $region9: #{actor_forward.1} parent=0 // pred_fallthru
    _
  %v11 = vld [vmem:[%s0] sm:$0xff]
  %v12 = vld [vmem:[%s1] sm:$0x1]
  %14 = vset.pattern.permute.xlu0 0
  %15 = vperm.xlu0 %14, %v11
  %v16 = vpop.permute.xlu0 %15
  %v18 = vlaneseq
  %v19 = vshrl.u32 %v18, 7
  %v20 = vsub.s32 0, %v19
  %v21 = vrot.slane %v12, %v20
  %v22 = vmul.f32 %v16, %v21
  %v23 = vld [vmem:[%s1 + $0x1] sm:$0x1]
  %24 = vset.pattern.permute.xlu0 1
  %25 = vperm.xlu0 %24, %v11
  %v26 = vpop.permute.xlu0 %25
  %v28 = vlaneseq
  %v29 = vshrl.u32 %v28, 7
  %v30 = vsub.s32 0, %v29
  %v31 = vrot.slane %v23, %v30
  %v32 = vmul.f32 %v26, %v31
  %v33 = vadd.f32 %v22, %v32
  %v34 = vld [vmem:[%s1 + $0x2] sm:$0x1]
  %35 = vset.pattern.permute.xlu0 2
  %36 = vperm.xlu0 %35, %v11
  %v37 = vpop.permute.xlu0 %36
  %v39 = vlaneseq
  %v40 = vshrl.u32 %v39, 7
  %v41 = vsub.s32 0, %v40
  %v42 = vrot.slane %v34, %v41
  %v43 = vmul.f32 %v37, %v42
  %v44 = vadd.f32 %v33, %v43
  %v45 = vld [vmem:[%s1 + $0x3] sm:$0x1]
  %46 = vset.pattern.permute.xlu0 3
  %47 = vperm.xlu0 %46, %v11
  %v48 = vpop.permute.xlu0 %47
  %v50 = vlaneseq
  %v51 = vshrl.u32 %v50, 7
  %v52 = vsub.s32 0, %v51
  %v53 = vrot.slane %v45, %v52
  %v54 = vmul.f32 %v48, %v53
  %v55 = vadd.f32 %v44, %v54
  %v56 = vld [vmem:[%s1 + $0x4] sm:$0x1]
  %v57 = vlaneseq
  %v58 = vshrl.u32 %v57, 7
  %v59 = vsub.s32 0, %v58
  %v60 = vrot.slane %v56, %v59
  %v61 = vadd.f32 %v55, %v60
  %v62 = vmax.f32 %v61, 0.0
  %v63 = vld [vmem:[%s1 + $0x5] sm:$0x1]
  %v64 = vlaneseq
  %v65 = vshrl.u32 %v64, 7
  %v66 = vsub.s32 0, %v65
  %v67 = vrot.slane %v63, %v66
  %v68 = vmul.f32 %v62, %v67
  %69 = vadd.xlane.f32.xlu0 %v68
  %v70 = vpop.xlane.xlu0 %69
  %v71 = vld [vmem:[%s1 + $0x6] sm:$0x1]
  %v72 = vlaneseq
  %v73 = vshrl.u32 %v72, 7
  %v74 = vsub.s32 0, %v73
  %v75 = vrot.slane %v71, %v74
  %v76 = vmul.f32 %v62, %v75
  %77 = vadd.xlane.f32.xlu0 %v76
  %v78 = vpop.xlane.xlu0 %77
  %vm79 = vcmask 7168
  %v80 = vsel %vm79, %v70, %v78
  %v81 = vld [vmem:[%s1 + $0x7] sm:$0x1]
  %v82 = vlaneseq
  %v83 = vshrl.u32 %v82, 7
  %v84 = vsub.s32 0, %v83
  %v85 = vrot.slane %v81, %v84
  %v86 = vadd.f32 %v80, %v85
  %vm87 = vcmask 15360
  %v88 = vsel %vm87, %v86, -inf
  %v89 = vrot.slane %v88, 4
  %v90 = vmax.f32 %v88, %v89
  %v91 = vrot.slane %v90, 2
  %v92 = vmax.f32 %v90, %v91
  %v93 = vrot.slane %v92, 1
  %v94 = vmax.f32 %v92, %v93
  %v95 = vsub.f32 %v86, %v94
  %v96 = vmul.f32 %v95, 1.442695
  %v97 = vpow.pop %v96
  %v98 = vsel %vm87, %v97, 0.0
  %v99 = vrot.slane %v98, 4
  %v100 = vadd.f32 %v98, %v99
  %v101 = vrot.slane %v100, 2
  %v102 = vadd.f32 %v100, %v101
  %v103 = vrot.slane %v102, 1
  %v104 = vadd.f32 %v102, %v103
  %v105 = vrcp.pop %v104
  %v106 = vmul.f32 %v97, %v105
  %107 = vst.msk [vmem:[%s2] sm:$0xff] %vm87, %v106
  // Predicated region
  $region10: #{actor_forward.1} parent=0 // pred_check
    _
  $region11: #{actor_forward.1} parent=0 // pred_check_branch
    %109 = sbr.rel (0) target = $region13
  $region12: #{actor_forward.1} parent=0 // pred_region
    _
  $region13: #{actor_forward.1} parent=0 // pred_fallthru
    _
  // Predicated region
  $region14: #{actor_forward.1} parent=0 // pred_check
    _
  $region15: #{actor_forward.1} parent=0 // pred_check_branch
    %111 = sbr.rel (0) target = $region17
  $region16: #{actor_forward.1} parent=0 // pred_region
    _
  $region17: #{actor_forward.1} parent=0 // pred_fallthru
    _

</llo_original>
